<compile_context>
chip_gen: v7x
topology: tpu7x:2x2x1
jax: 0.10.0
libtpu: 0.0.40
codegen_flags: <defaults>
</compile_context>

<pallas_src>
import functools
import math

import jax
import jax.numpy as jnp
from jax import lax
from jax.experimental import pallas as pl
from jax.experimental.pallas import tpu as pltpu

_LANE = 128


def _round_up(x: int, m: int) -> int:
    return (x + m - 1) // m * m


def _vmem_capacity_bytes() -> int:
    try:
        info = pltpu.get_tpu_info()
        cap = int(getattr(info, "vmem_capacity_bytes", 0))
        if cap > 0:
            return cap
    except Exception:
        pass
    return 64 * 1024 * 1024  # conservative fallback (v7x per-TC VMEM)


# ---------------------------------------------------------------------------
# Kernels
# ---------------------------------------------------------------------------
def _klmc_single_pass_kernel(scores_ref, sdens_ref, gdens_ref, out_ref, *,
                             eps, num_samples, log_m):
    """Whole MC row per grid step: plain (non-online) logsumexp, no scratch."""
    s = scores_ref[...].astype(jnp.float32)
    sd = sdens_ref[...].astype(jnp.float32) + eps
    gd = gdens_ref[...].astype(jnp.float32)

    inv_sd = pl.reciprocal(sd)               # exact reciprocal (EUP slot)
    exp_val = s - jnp.log(sd)                # scores - log(sample_density + eps)
    weighted = s * gd * inv_sd               # scores * gt_density / (sd + eps)

    m = jnp.max(exp_val, axis=-1, keepdims=True)
    lse = m + jnp.log(jnp.sum(jnp.exp(exp_val - m), axis=-1, keepdims=True))
    mean_w = jnp.sum(weighted, axis=-1, keepdims=True) * (1.0 / num_samples)
    out_ref[...] = lse - log_m - mean_w


def _klmc_stream_kernel(scores_ref, sdens_ref, gdens_ref, out_ref,
                        m_sc, l_sc, w_sc, *,
                        eps, num_samples, tile_s, log_m, needs_mask):
    """MC axis streamed with an online logsumexp (used only for huge rows)."""
    k = pl.program_id(1)

    @pl.when(k == 0)
    def _():
        m_sc[...] = jnp.full(m_sc.shape, -jnp.inf, m_sc.dtype)
        l_sc[...] = jnp.zeros(l_sc.shape, l_sc.dtype)
        w_sc[...] = jnp.zeros(w_sc.shape, w_sc.dtype)

    s = scores_ref[...].astype(jnp.float32)
    sd = sdens_ref[...].astype(jnp.float32) + eps
    gd = gdens_ref[...].astype(jnp.float32)

    inv_sd = pl.reciprocal(sd)
    exp_val = s - jnp.log(sd)
    weighted = s * gd * inv_sd

    if needs_mask:
        # Only the last MC tile can contain out-of-bounds (garbage) lanes;
        # the compare+select is a few VPU ops under an HBM-bound roofline.
        lane = lax.broadcasted_iota(jnp.int32, s.shape, 1) + k * tile_s
        valid = lane < num_samples
        exp_val = jnp.where(valid, exp_val, -jnp.inf)
        weighted = jnp.where(valid, weighted, 0.0)

    m_prev = m_sc[...]
    m_new = jnp.maximum(m_prev, jnp.max(exp_val, axis=-1, keepdims=True))
    alpha = jnp.exp(m_prev - m_new)
    p = jnp.exp(exp_val - m_new)
    l_sc[...] = alpha * l_sc[...] + jnp.sum(p, axis=-1, keepdims=True)
    w_sc[...] = w_sc[...] + jnp.sum(weighted, axis=-1, keepdims=True)
    m_sc[...] = m_new

    @pl.when(k == pl.num_programs(1) - 1)
    def _():
        lse = m_sc[...] + jnp.log(l_sc[...])
        out_ref[...] = lse - log_m - w_sc[...] * (1.0 / num_samples)


# ---------------------------------------------------------------------------
# Wrapper
# ---------------------------------------------------------------------------
def klmc_loss(scores, sample_density, gt_density, eps: float = 0.0, *,
              block_bytes: int = 2 * 1024 * 1024):
    """Pallas implementation of KLMCLoss.forward (mc_dim=-1)."""
    num_imgs, num_samples = scores.shape
    itemsize = jnp.dtype(scores.dtype).itemsize
    sublane = max(8, 32 // itemsize)          # 8 for f32, 16 for bf16, 32 for int8
    vmem_cap = _vmem_capacity_bytes()

    # Per-input block budget (elements); keep 3 inputs x 2 buffers well under VMEM.
    block_bytes = min(block_bytes, max(vmem_cap // 16, sublane * _LANE * itemsize))
    block_elems = max(block_bytes // itemsize, sublane * _LANE)
    padded_s = _round_up(num_samples, _LANE)

    single_pass = padded_s * sublane <= block_elems

    if single_pass:
        # Whole MC row per step; grid has only the image axis.
        tile_s = num_samples
        grid_s = 1
        rows_fit = max(sublane, (block_elems // padded_s) // sublane * sublane)
        if num_imgs <= sublane:
            tile_imgs = num_imgs               # full-dim block, no alignment needed
        else:
            tile_imgs = min(rows_fit, _round_up(num_imgs, sublane))
            if num_imgs >= 2 * sublane:
                # Keep >= 2 image tiles so both v7x TensorCores get work.
                tile_imgs = min(tile_imgs,
                                _round_up(pl.cdiv(num_imgs, 2), sublane))
    else:
        # Stream the MC axis (rows too long for a single block).
        tile_imgs = num_imgs if num_imgs <= sublane else sublane
        tile_s = max(_LANE, (block_elems // tile_imgs) // _LANE * _LANE)
        tile_s = min(tile_s, padded_s)
        grid_s = pl.cdiv(num_samples, tile_s)

    grid_i = pl.cdiv(num_imgs, tile_imgs)
    log_m = float(math.log(num_samples))

    # VMEM limit: actual double-buffered input footprint + margin, capped per chip.
    in_block_bytes = _round_up(tile_imgs, sublane) * _round_up(tile_s, _LANE) * itemsize
    vmem_need = 3 * 2 * in_block_bytes + (2 << 20)
    vmem_limit = int(min(max(vmem_need, 4 << 20), vmem_cap // 2))

    cost = pl.CostEstimate(
        flops=8 * num_imgs * num_samples,
        transcendentals=3 * num_imgs * num_samples,
        bytes_accessed=3 * itemsize * num_imgs * num_samples + 4 * num_imgs,
    )
    out_shape = jax.ShapeDtypeStruct((num_imgs, 1), jnp.float32)

    if single_pass:
        kernel = functools.partial(
            _klmc_single_pass_kernel,
            eps=float(eps), num_samples=num_samples, log_m=log_m)
        per_img = pl.pallas_call(
            kernel,
            out_shape=out_shape,
            grid=(grid_i,),
            in_specs=[pl.BlockSpec((tile_imgs, tile_s), lambda i: (i, 0))] * 3,
            out_specs=pl.BlockSpec((tile_imgs, 1), lambda i: (i, 0)),
            compiler_params=pltpu.CompilerParams(
                dimension_semantics=("parallel",),
                vmem_limit_bytes=vmem_limit),
            cost_estimate=cost,
        )(scores, sample_density, gt_density)
    else:
        needs_mask = (num_samples % tile_s) != 0
        kernel = functools.partial(
            _klmc_stream_kernel,
            eps=float(eps), num_samples=num_samples, tile_s=tile_s,
            log_m=log_m, needs_mask=needs_mask)
        per_img = pl.pallas_call(
            kernel,
            out_shape=out_shape,
            grid=(grid_i, grid_s),
            in_specs=[pl.BlockSpec((tile_imgs, tile_s), lambda i, k: (i, k))] * 3,
            out_specs=pl.BlockSpec((tile_imgs, 1), lambda i, k: (i, 0)),
            scratch_shapes=[pltpu.VMEM((tile_imgs, 1), jnp.float32)] * 3,
            compiler_params=pltpu.CompilerParams(
                dimension_semantics=("parallel", "arbitrary"),
                vmem_limit_bytes=vmem_limit),
            cost_estimate=cost,
        )(scores, sample_density, gt_density)

    # Final mean over images — trivial fused XLA op in the wrapper.
    return jnp.mean(per_img[:, 0])


def klmc_loss_ref(scores, sample_density, gt_density, eps: float = 0.0):
    """Pure-JAX reference for correctness checking."""
    exp_val = scores - jnp.log(sample_density + eps)
    loss = (
        jax.nn.logsumexp(exp_val, axis=-1)
        - math.log(scores.shape[-1])
        - jnp.mean(scores * (gt_density / (sample_density + eps)), axis=-1)
    )
    return loss.mean()


def _make_inputs(key, num_imgs, num_samples):
    k1, k2, k3 = jax.random.split(key, 3)
    scores = jax.random.normal(k1, (num_imgs, num_samples), dtype=jnp.float32)
    sample_density = jax.nn.softplus(
        jax.random.normal(k2, (num_imgs, num_samples), dtype=jnp.float32)) + 0.1
    gt_density = jax.nn.softplus(
        jax.random.normal(k3, (num_imgs, num_samples), dtype=jnp.float32)) + 0.1
    return scores, sample_density, gt_density


if __name__ == "__main__":
    key = jax.random.PRNGKey(0)
    keys = jax.random.split(key, 5)

    # (num_imgs, num_samples, eps, block_bytes) — block_bytes shrunk in some
    # cases purely to force/exercise the streaming (online-LSE) path.
    cases = [
        (2, 1024, 0.0, None),        # aligned, single-pass fast path
        (3, 800, 1e-6, None),        # unaligned lanes, full-row block, no pad
        (3, 800, 1e-6, 8192),        # forced streaming path + ragged MC mask
        (20, 896, 0.0, None),        # 2 image tiles (megacore) + ragged image edge
        (12, 800, 1e-6, 8192),       # streaming path + ragged image edge
    ]

    for (n_img, n_s, eps, bb), k in zip(cases, keys):
        s, sd, gd = _make_inputs(k, n_img, n_s)
        if bb is None:
            out = klmc_loss(s, sd, gd, eps=eps)
        else:
            out = klmc_loss(s, sd, gd, eps=eps, block_bytes=bb)
        out = jax.block_until_ready(out)
        ref = klmc_loss_ref(s, sd, gd, eps=eps)
        assert jnp.allclose(out, ref, atol=1e-5, rtol=1e-5), (n_img, n_s, out, ref)

    print("KERNEL_OK")
</pallas_src>

<mosaic_0001>
module attributes {stable_mosaic.version = 11 : i64} {
  func.func @_klmc_single_pass_kernel(%arg0: i32, %arg1: memref<2x1024xf32, #tpu.memory_space<vmem>>, %arg2: memref<2x1024xf32, #tpu.memory_space<vmem>>, %arg3: memref<2x1024xf32, #tpu.memory_space<vmem>>, %arg4: memref<2x1xf32, #tpu.memory_space<vmem>>) attributes {dimension_semantics = [#tpu.dimension_semantics<parallel>], iteration_bounds = array<i64: 1>, scalar_prefetch = 0 : i64, scratch_operands = 0 : i64, tpu.core_type = #tpu.core_type<tc>, window_params = [{transform_indices = @transform_0, window_bounds = array<i64: 2, 1024>}, {transform_indices = @transform_1, window_bounds = array<i64: 2, 1024>}, {transform_indices = @transform_2, window_bounds = array<i64: 2, 1024>}, {transform_indices = @transform_3, window_bounds = array<i64: 2, 1>}]} {
    %c0 = arith.constant 0 : index
    %c0_0 = arith.constant 0 : index
    %0 = vector.load %arg1[%c0, %c0_0] : memref<2x1024xf32, #tpu.memory_space<vmem>>, vector<2x1024xf32>
    %c0_1 = arith.constant 0 : index
    %c0_2 = arith.constant 0 : index
    %1 = vector.load %arg2[%c0_1, %c0_2] : memref<2x1024xf32, #tpu.memory_space<vmem>>, vector<2x1024xf32>
    %cst = arith.constant 0.000000e+00 : f32
    %2 = vector.broadcast %cst : f32 to vector<2x1024xf32>
    %3 = arith.addf %1, %2 : vector<2x1024xf32>
    %c0_3 = arith.constant 0 : index
    %c0_4 = arith.constant 0 : index
    %4 = vector.load %arg3[%c0_3, %c0_4] : memref<2x1024xf32, #tpu.memory_space<vmem>>, vector<2x1024xf32>
    %5 = tpu.reciprocal %3 : vector<2x1024xf32> -> vector<2x1024xf32>
    %6 = math.log %3 : vector<2x1024xf32>
    %7 = arith.subf %0, %6 : vector<2x1024xf32>
    %8 = arith.mulf %0, %4 : vector<2x1024xf32>
    %9 = arith.mulf %8, %5 : vector<2x1024xf32>
    %cst_5 = arith.constant dense<0xFF800000> : vector<2xf32>
    %10 = vector.multi_reduction <maximumf>, %7, %cst_5 [1] : vector<2x1024xf32> to vector<2xf32>
    %11 = vector.shape_cast %10 : vector<2xf32> to vector<2x1xf32>
    %12 = vector.broadcast %11 : vector<2x1xf32> to vector<2x1024xf32>
    %13 = arith.subf %7, %12 : vector<2x1024xf32>
    %14 = math.exp %13 : vector<2x1024xf32>
    %cst_6 = arith.constant dense<0.000000e+00> : vector<2xf32>
    %15 = vector.multi_reduction <add>, %14, %cst_6 [1] : vector<2x1024xf32> to vector<2xf32>
    %16 = vector.shape_cast %15 : vector<2xf32> to vector<2x1xf32>
    %17 = math.log %16 : vector<2x1xf32>
    %18 = arith.addf %11, %17 : vector<2x1xf32>
    %cst_7 = arith.constant dense<0.000000e+00> : vector<2xf32>
    %19 = vector.multi_reduction <add>, %9, %cst_7 [1] : vector<2x1024xf32> to vector<2xf32>
    %20 = vector.shape_cast %19 : vector<2xf32> to vector<2x1xf32>
    %cst_8 = arith.constant 9.765625E-4 : f32
    %21 = vector.broadcast %cst_8 : f32 to vector<2x1xf32>
    %22 = arith.mulf %20, %21 : vector<2x1xf32>
    %cst_9 = arith.constant 6.93147182 : f32
    %23 = vector.broadcast %cst_9 : f32 to vector<2x1xf32>
    %24 = arith.subf %18, %23 : vector<2x1xf32>
    %25 = arith.subf %24, %22 : vector<2x1xf32>
    %c0_10 = arith.constant 0 : index
    %c0_11 = arith.constant 0 : index
    %26 = vector.load %arg4[%c0_10, %c0_11] : memref<2x1xf32, #tpu.memory_space<vmem>>, vector<2x1xf32>
    tpu.vector_store %arg4[%c0_10, %c0_11], %25 {strides = array<i32>} : memref<2x1xf32, #tpu.memory_space<vmem>>, vector<2x1xf32>,
    return
  }
  func.func @transform_0(%arg0: i32) -> (i32, i32) {
    %c0_i32 = arith.constant 0 : i32
    %c0_i32_0 = arith.constant 0 : i32
    return %arg0, %c0_i32 : i32, i32
  }
  func.func @transform_1(%arg0: i32) -> (i32, i32) {
    %c0_i32 = arith.constant 0 : i32
    %c0_i32_0 = arith.constant 0 : i32
    return %arg0, %c0_i32 : i32, i32
  }
  func.func @transform_2(%arg0: i32) -> (i32, i32) {
    %c0_i32 = arith.constant 0 : i32
    %c0_i32_0 = arith.constant 0 : i32
    return %arg0, %c0_i32 : i32, i32
  }
  func.func @transform_3(%arg0: i32) -> (i32, i32) {
    %c0_i32 = arith.constant 0 : i32
    %c0_i32_0 = arith.constant 0 : i32
    return %arg0, %c0_i32 : i32, i32
  }
}

</mosaic_0001>

<llo_original>
// kernel: tpu_custom_call.1
$region0: #{tpu_custom_call.1}
  #allocation0 [shape = 'u32[]', space=smem, size = 0x4, offset = 0x4, fixed_abs, tag = 'smem constant byte address 0x4 - core index']
  #allocation1 [shape = 'u32[144,128]{1,0:T(1,128)}', space=vmem, size = 0x12000, scoped, tag = 'internal scratch']
  %s0 = inlined_call_operand.hbm [shape: f32[2,1024], index: 0, kind: input, shape index: {}]
  %s1 = inlined_call_operand.hbm [shape: f32[2,1024], index: 1, kind: input, shape index: {}]
  %s2 = inlined_call_operand.hbm [shape: f32[2,1024], index: 2, kind: input, shape index: {}]
  %s3 = inlined_call_operand.vmem [shape: f32[2,1], index: 3, kind: output, shape index: {}]
  %s4 = sld [smem:[#allocation0]]
  $region34: #{tpu_custom_call.1} parent=0
    _
  %s6 = ssub.s32 1, %s4
  %s7 = scalar_select 0, %s6, %s4
  $region1: #{tpu_custom_call.1} parent=0
    #allocation2 [shape = 'u8[8192]{0}', space=vmem, size = 0x2000, scoped, tag = 'input window, operand 0, single buffered']
    #allocation3 [shape = 's32[1]{0}', space=sflag, size = 0x4, scoped, tag = 'scoped memory for tpu_custom_call.1']
    #allocation4 [shape = 'u8[8192]{0}', space=vmem, size = 0x2000, scoped, tag = 'input window, operand 1, single buffered']
    #allocation5 [shape = 's32[1]{0}', space=sflag, size = 0x4, scoped, tag = 'scoped memory for tpu_custom_call.1']
    #allocation6 [shape = 'u8[8192]{0}', space=vmem, size = 0x2000, scoped, tag = 'input window, operand 2, single buffered']
    %8 = vsyncpa [#allocation3], 0
    %9 = vsyncpa [#allocation5], 0
    // Predicated region
    $region2: #{tpu_custom_call.1} parent=1 // pred_check
      _
    $region3: #{tpu_custom_call.1} parent=1 // pred_check_branch
      %11 = sbr.rel (0) target = $region5
    $region4: #{tpu_custom_call.1} parent=1 // pred_region
      %s13 = ssub.s32 256, 256
      %14 = vsyncadd [#allocation3], %s13
      %s16 = sshll.u32 [#allocation2], 4
      %s17 = int_to_ptr.vmem [resolvable:$true] %s16
      %19 = dma.hbm_to_vmem [thread:$0]  %s0, 256, %s17, [#allocation3]
    $region5: #{tpu_custom_call.1} parent=1 // pred_fallthru
      _
    // Predicated region
    $region6: #{tpu_custom_call.1} parent=1 // pred_check
      _
    $region7: #{tpu_custom_call.1} parent=1 // pred_check_branch
      %21 = sbr.rel (0) target = $region9
    $region8: #{tpu_custom_call.1} parent=1 // pred_region
      %s23 = ssub.s32 256, 256
      %24 = vsyncadd [#allocation5], %s23
      %s26 = sshll.u32 [#allocation4], 4
      %s27 = int_to_ptr.vmem [resolvable:$true] %s26
      %29 = dma.hbm_to_vmem [thread:$0]  %s1, 256, %s27, [#allocation5]
    $region9: #{tpu_custom_call.1} parent=1 // pred_fallthru
      _
    // Predicated region
    $region10: #{tpu_custom_call.1} parent=1 // pred_check
      _
    $region11: #{tpu_custom_call.1} parent=1 // pred_check_branch
      %31 = sbr.rel (0) target = $region13
    $region12: #{tpu_custom_call.1} parent=1 // pred_region
      %s33 = ssub.s32 256, 256
      %34 = vsyncadd [#allocation5], %s33
      %s36 = sshll.u32 [#allocation6], 4
      %s37 = int_to_ptr.vmem [resolvable:$true] %s36
      %39 = dma.hbm_to_vmem [thread:$0]  %s2, 256, %s37, [#allocation5]
    $region13: #{tpu_custom_call.1} parent=1 // pred_fallthru
      _
    // Predicated region
    $region14: #{tpu_custom_call.1} parent=1 // pred_check
      _
    $region15: #{tpu_custom_call.1} parent=1 // pred_check_branch
      %41 = sbr.rel (0) target = $region17
    $region16: #{tpu_custom_call.1} parent=1 // pred_region
      %42 = dma.done [#allocation3], 256
    $region17: #{tpu_custom_call.1} parent=1 // pred_fallthru
      _
    // Predicated region
    $region18: #{tpu_custom_call.1} parent=1 // pred_check
      _
    $region19: #{tpu_custom_call.1} parent=1 // pred_check_branch
      %44 = sbr.rel (0) target = $region21
    $region20: #{tpu_custom_call.1} parent=1 // pred_region
      %45 = dma.done [#allocation5], 256
    $region21: #{tpu_custom_call.1} parent=1 // pred_fallthru
      _
    // Predicated region
    $region22: #{tpu_custom_call.1} parent=1 // pred_check
      _
    $region23: #{tpu_custom_call.1} parent=1 // pred_check_branch
      %47 = sbr.rel (0) target = $region25
    $region24: #{tpu_custom_call.1} parent=1 // pred_region
      %48 = dma.done [#allocation5], 256
    $region25: #{tpu_custom_call.1} parent=1 // pred_fallthru
      _
    %v49 = vld [vmem:[#allocation2] sm:$0xff]
    %v50 = vld [vmem:[#allocation2 + $0x8] sm:$0xff]
    %v51 = vld [vmem:[#allocation4] sm:$0xff]
    %v52 = vld [vmem:[#allocation4 + $0x8] sm:$0xff]
    %v53 = vadd.f32 %v51, 0.0
    %v54 = vadd.f32 %v52, 0.0
    %v55 = vld [vmem:[#allocation6] sm:$0xff]
    %v56 = vld [vmem:[#allocation6 + $0x8] sm:$0xff]
    %v57 = vrcp.pop %v53
    %v58 = vrcp.pop %v54
    %v59 = vlog2.pop %v53
    %v60 = vmul.f32 %v59, 0.6931472
    %v61 = vlog2.pop %v54
    %v62 = vmul.f32 %v61, 0.6931472
    %v63 = vsub.f32 %v49, %v60
    %v64 = vsub.f32 %v50, %v62
    %v65 = vmul.f32 %v49, %v55
    %v66 = vmul.f32 %v50, %v56
    %v67 = vmul.f32 %v65, %v57
    %v68 = vmul.f32 %v66, %v58
    %v71 = vcombine.high %v63, %v63
    %v73 = vunpack.c.l.s4 1983009808
    %v74 = vunpack.c.0.s8 %v73
    %v75 = vlaneseq
    %v76 = vshrl.u32 %v75, 7
    %v77 = vsub.s32 %v74, %v76
    %v78 = vrot.slane %v63, %v77
    %v80 = vunpack.c.l.s4 1983009808
    %v81 = vunpack.c.0.s8 %v80
    %v82 = vlaneseq
    %v83 = vshrl.u32 %v82, 7
    %v84 = vsub.s32 %v81, %v83
    %v85 = vrot.slane %v71, %v84
    %v86 = vcombine.high %v78, %v78
    %v87 = vcombine.high %v85, %v85
    %v88 = vcombine.high %v64, %v64
    %v90 = vunpack.c.l.s4 1983009808
    %v91 = vunpack.c.0.s8 %v90
    %v92 = vlaneseq
    %v93 = vshrl.u32 %v92, 7
    %v94 = vsub.s32 %v91, %v93
    %v95 = vrot.slane %v64, %v94
    %v97 = vunpack.c.l.s4 1983009808
    %v98 = vunpack.c.0.s8 %v97
    %v99 = vlaneseq
    %v100 = vshrl.u32 %v99, 7
    %v101 = vsub.s32 %v98, %v100
    %v102 = vrot.slane %v88, %v101
    %v103 = vcombine.high %v95, %v95
    %v104 = vcombine.high %v102, %v102
    %vm113 = vcmask 1041408
    %v114 = vsel %vm113, %v78, -inf
    %v115 = vsel %vm113, %v86, -inf
    %v116 = vsel %vm113, %v85, -inf
    %v117 = vsel %vm113, %v87, -inf
    %v118 = vsel %vm113, %v95, -inf
    %v119 = vmax.f32 %v114, %v118
    %v120 = vsel %vm113, %v103, -inf
    %v121 = vmax.f32 %v115, %v120
    %v122 = vsel %vm113, %v102, -inf
    %v123 = vmax.f32 %v116, %v122
    %v124 = vsel %vm113, %v104, -inf
    %v125 = vmax.f32 %v117, %v124
    %v126 = vmax.f32 %v119, %v121
    %v127 = vmax.f32 %v123, %v125
    %v128 = vmax.f32 %v126, %v127
    %129 = vmax.xlane.f32.xlu0 %v128
    %v130 = vpop.xlane.xlu0 %129
    %v133 = vunpack.c.l.s4 269488144
    %v134 = vunpack.c.0.s8 %v133
    %v135 = vlaneseq
    %v136 = vshrl.u32 %v135, 7
    %v137 = vsub.s32 %v134, %v136
    %v138 = vrot.slane %v130, %v137
    %v140 = vsub.f32 %v63, %v138
    %v141 = vsub.f32 %v64, %v138
    %v142 = vmul.f32 %v140, 1.442695
    %v143 = vpow.pop %v142
    %v144 = vmul.f32 %v141, 1.442695
    %v145 = vpow.pop %v144
    %v148 = vcombine.high %v143, %v143
    %v150 = vunpack.c.l.s4 1983009808
    %v151 = vunpack.c.0.s8 %v150
    %v152 = vlaneseq
    %v153 = vshrl.u32 %v152, 7
    %v154 = vsub.s32 %v151, %v153
    %v155 = vrot.slane %v143, %v154
    %v157 = vunpack.c.l.s4 1983009808
    %v158 = vunpack.c.0.s8 %v157
    %v159 = vlaneseq
    %v160 = vshrl.u32 %v159, 7
    %v161 = vsub.s32 %v158, %v160
    %v162 = vrot.slane %v148, %v161
    %v163 = vcombine.high %v155, %v155
    %v164 = vcombine.high %v162, %v162
    %v165 = vcombine.high %v145, %v145
    %v167 = vunpack.c.l.s4 1983009808
    %v168 = vunpack.c.0.s8 %v167
    %v169 = vlaneseq
    %v170 = vshrl.u32 %v169, 7
    %v171 = vsub.s32 %v168, %v170
    %v172 = vrot.slane %v145, %v171
    %v174 = vunpack.c.l.s4 1983009808
    %v175 = vunpack.c.0.s8 %v174
    %v176 = vlaneseq
    %v177 = vshrl.u32 %v176, 7
    %v178 = vsub.s32 %v175, %v177
    %v179 = vrot.slane %v165, %v178
    %v180 = vcombine.high %v172, %v172
    %v181 = vcombine.high %v179, %v179
    %v190 = vsel %vm113, %v155, 0.0
    %v191 = vsel %vm113, %v163, 0.0
    %v192 = vadd.f32 %v190, %v191
    %v193 = vsel %vm113, %v162, 0.0
    %v194 = vadd.f32 %v192, %v193
    %v195 = vsel %vm113, %v164, 0.0
    %v196 = vadd.f32 %v194, %v195
    %v197 = vsel %vm113, %v172, 0.0
    %v198 = vadd.f32 %v196, %v197
    %v199 = vsel %vm113, %v180, 0.0
    %v200 = vadd.f32 %v198, %v199
    %v201 = vsel %vm113, %v179, 0.0
    %v202 = vadd.f32 %v200, %v201
    %v203 = vsel %vm113, %v181, 0.0
    %v204 = vadd.f32 %v202, %v203
    %205 = vadd.xlane.f32.xlu0 %v204
    %v206 = vpop.xlane.xlu0 %205
    %v207 = vlog2.pop %v206
    %v208 = vmul.f32 %v207, 0.6931472
    %v209 = vadd.f32 %v130, %v208
    %v212 = vcombine.high %v67, %v67
    %v214 = vunpack.c.l.s4 1983009808
    %v215 = vunpack.c.0.s8 %v214
    %v216 = vlaneseq
    %v217 = vshrl.u32 %v216, 7
    %v218 = vsub.s32 %v215, %v217
    %v219 = vrot.slane %v67, %v218
    %v221 = vunpack.c.l.s4 1983009808
    %v222 = vunpack.c.0.s8 %v221
    %v223 = vlaneseq
    %v224 = vshrl.u32 %v223, 7
    %v225 = vsub.s32 %v222, %v224
    %v226 = vrot.slane %v212, %v225
    %v227 = vcombine.high %v219, %v219
    %v228 = vcombine.high %v226, %v226
    %v229 = vcombine.high %v68, %v68
    %v231 = vunpack.c.l.s4 1983009808
    %v232 = vunpack.c.0.s8 %v231
    %v233 = vlaneseq
    %v234 = vshrl.u32 %v233, 7
    %v235 = vsub.s32 %v232, %v234
    %v236 = vrot.slane %v68, %v235
    %v238 = vunpack.c.l.s4 1983009808
    %v239 = vunpack.c.0.s8 %v238
    %v240 = vlaneseq
    %v241 = vshrl.u32 %v240, 7
    %v242 = vsub.s32 %v239, %v241
    %v243 = vrot.slane %v229, %v242
    %v244 = vcombine.high %v236, %v236
    %v245 = vcombine.high %v243, %v243
    %v254 = vsel %vm113, %v219, 0.0
    %v255 = vsel %vm113, %v227, 0.0
    %v256 = vadd.f32 %v254, %v255
    %v257 = vsel %vm113, %v226, 0.0
    %v258 = vadd.f32 %v256, %v257
    %v259 = vsel %vm113, %v228, 0.0
    %v260 = vadd.f32 %v258, %v259
    %v261 = vsel %vm113, %v236, 0.0
    %v262 = vadd.f32 %v260, %v261
    %v263 = vsel %vm113, %v244, 0.0
    %v264 = vadd.f32 %v262, %v263
    %v265 = vsel %vm113, %v243, 0.0
    %v266 = vadd.f32 %v264, %v265
    %v267 = vsel %vm113, %v245, 0.0
    %v268 = vadd.f32 %v266, %v267
    %269 = vadd.xlane.f32.xlu0 %v268
    %v270 = vpop.xlane.xlu0 %269
    %v271 = vmul.f32 %v270, 0.0009765625
    %v272 = vsub.f32 %v209, 6.931472
    %v273 = vsub.f32 %v272, %v271
    %vm274 = vcmask 1024
    %275 = vst.msk [vmem:[%s3] sm:$0x3] %vm274, %v273
    // Predicated region
    $region26: #{tpu_custom_call.1} parent=1 // pred_check
      _
    $region27: #{tpu_custom_call.1} parent=1 // pred_check_branch
      %277 = sbr.rel (0) target = $region29
    $region28: #{tpu_custom_call.1} parent=1 // pred_region
      _
    $region29: #{tpu_custom_call.1} parent=1 // pred_fallthru
      _
    // Predicated region
    $region30: #{tpu_custom_call.1} parent=1 // pred_check
      _
    $region31: #{tpu_custom_call.1} parent=1 // pred_check_branch
      %279 = sbr.rel (0) target = $region33
    $region32: #{tpu_custom_call.1} parent=1 // pred_region
      _
    $region33: #{tpu_custom_call.1} parent=1 // pred_fallthru
      _
    %280 = vsyncpa [#allocation3], 1
    %281 = vsyncpa [#allocation5], 1

</llo_original>
